<compile_context>
chip_gen: v6e
topology: v6e:2x2x1
jax: 0.10.0
libtpu: 0.0.40
codegen_flags: <defaults>
</compile_context>

<pallas_src>
import math

import jax
import jax.numpy as jnp
from jax.experimental import pallas as pl
from jax.experimental.pallas import tpu as pltpu

_PI = math.pi
_HALF_PI = math.pi / 2.0


def _atan_poly(x):
    """Single-precision arctan (Cephes atanf), branch-free via jnp.where.

    Only mul/add/div/select -> plain VPU work, ~2e-7 rad max error.
    Handles +/-inf inputs gracefully (returns +/-pi/2).
    """
    sgn = jnp.where(x < 0.0, -1.0, 1.0)
    ax = jnp.abs(x)

    t3p8 = 2.414213562373095   # tan(3*pi/8)
    t1p8 = 0.4142135623730951  # tan(pi/8)
    big = ax > t3p8
    mid = jnp.logical_and(jnp.logical_not(big), ax > t1p8)

    safe = jnp.where(big, ax, 1.0)                 # keep unselected lanes finite
    xr = jnp.where(big, -1.0 / safe,
                   jnp.where(mid, (ax - 1.0) / (ax + 1.0), ax))
    off = jnp.where(big, _HALF_PI, jnp.where(mid, _PI / 4.0, 0.0))

    z = xr * xr
    p = (((8.05374449538e-2 * z - 1.38776856032e-1) * z
          + 1.99777106478e-1) * z - 3.33329491539e-1)
    return sgn * (off + p * z * xr + xr)


def _grid_gen_kernel(u_ref, a_ref, g_ref, o_ref):
    """One (batch, spatial-tile) block.

    u_ref: (B,)   per-batch scalar (SMEM)
    a_ref: (12,T) input1 channels-first (rows 0-3 -> x, 4-7 -> y, 8-11 -> z)
    g_ref: (3,T)  fixed grid3d planes (gx, gy, gz); 4th plane is all-ones
    o_ref: (2,T)  output planes (theta, shifted-phi)
    """
    u = u_ref[pl.program_id(0)]

    gx = g_ref[0:1, :]
    gy = g_ref[1:2, :]
    gz = g_ref[2:3, :]

    def proj(c):
        return (gx * a_ref[c:c + 1, :] + gy * a_ref[c + 1:c + 2, :]
                + gz * a_ref[c + 2:c + 3, :] + a_ref[c + 3:c + 4, :])

    x = proj(0)
    y = proj(4)
    z = proj(8)

    r = jnp.sqrt(x * x + y * y + z * z) + 1e-5
    w = z / r                                        # strictly inside (-1, 1)

    # theta = acos(w)/(pi/2) - 1, with acos(w) = 2*atan(sqrt((1-w)/(1+w)))
    theta = 2.0 * _atan_poly(jnp.sqrt((1.0 - w) / (1.0 + w)))
    theta = theta * (1.0 / _HALF_PI) - 1.0

    # phi = [atan(y/(x+eps)) + pi*(x<0)*((y>=0)-(y<0))] / pi
    phi = _atan_poly(y / (x + 1e-5))
    quad = jnp.where(x < 0.0, jnp.where(y >= 0.0, _PI, -_PI), 0.0)
    phi = (phi + quad) * (1.0 / _PI)

    # output1 = atan(tan(pi/2*(phi + u)))/(pi/2)   (batchgrid[..., 2] == 1)
    v = _HALF_PI * (phi + u)
    out1 = _atan_poly(jnp.sin(v) / jnp.cos(v)) * (1.0 / _HALF_PI)

    o_ref[0:1, :] = theta
    o_ref[1:2, :] = out1


def _make_grid3d_planes(height, width):
    """(gx, gy, gz) planes of the module's constant grid3d, shape (3, H*W)."""
    gi = (-1.0 + 2.0 * jnp.arange(height, dtype=jnp.float32) / height)[:, None]
    gj = (-1.0 + 2.0 * jnp.arange(width, dtype=jnp.float32) / width)[None, :]
    theta0 = gi * _HALF_PI + _HALF_PI            # (H, 1)
    phi0 = gj * _PI                              # (1, W)
    gx = jnp.sin(theta0) * jnp.cos(phi0)
    gy = jnp.sin(theta0) * jnp.sin(phi0)
    gz = jnp.broadcast_to(jnp.cos(theta0), (height, width))
    return jnp.stack([gx, gy, gz], axis=0).reshape(3, height * width)


def dense_affine_3d_grid_gen_rotate(input1, input2):
    """input1: (B, H, W, 12) f32, input2: (B,) f32 -> (B, H, W, 2) f32."""
    B, H, W, C = input1.shape
    assert C == 12, "input1 must carry 12 per-pixel affine parameters"
    HW = H * W

    # Spatial tile: single block up to 8K lanes; otherwise a lane-aligned
    # divisor so large H*W still pipelines and stays inside v7x's 64 MiB VMEM.
    tile_hw = HW
    if HW > 8192:
        for cand in (8192, 4096, 2048, 1024, 512, 256, 128):
            if HW % cand == 0:
                tile_hw = cand
                break
    n_tiles = HW // tile_hw

    gxyz = _make_grid3d_planes(H, W)                                    # (3, HW)
    a = jnp.transpose(input1.reshape(B, HW, 12), (0, 2, 1))             # (B, 12, HW)
    a = a.astype(jnp.float32)
    u = input2.reshape(B).astype(jnp.float32)

    cost = pl.CostEstimate(
        flops=90 * B * HW,
        transcendentals=4 * B * HW,
        bytes_accessed=4 * (B * HW * 12 + 3 * HW + B * 2 * HW + B),
    )

    out = pl.pallas_call(
        _grid_gen_kernel,
        out_shape=jax.ShapeDtypeStruct((B, 2, HW), jnp.float32),
        grid=(B, n_tiles),
        in_specs=[
            pl.BlockSpec(memory_space=pltpu.MemorySpace.SMEM),            # u
            pl.BlockSpec((None, 12, tile_hw), lambda b, t: (b, 0, t)),    # a
            pl.BlockSpec((3, tile_hw), lambda b, t: (0, t)),              # gxyz
        ],
        out_specs=pl.BlockSpec((None, 2, tile_hw), lambda b, t: (b, 0, t)),
        compiler_params=pltpu.CompilerParams(
            dimension_semantics=("parallel", "parallel")),
        cost_estimate=cost,
    )(u, a, gxyz)

    return jnp.transpose(out.reshape(B, 2, H, W), (0, 2, 3, 1))          # (B, H, W, 2)


def _reference(input1, input2):
    """Faithful JAX port of DenseAffine3DGridGen_rotate.forward."""
    B, H, W, _ = input1.shape
    g3 = _make_grid3d_planes(H, W).reshape(3, H, W)
    grid3d = jnp.concatenate(
        [jnp.transpose(g3, (1, 2, 0)), jnp.ones((H, W, 1), jnp.float32)], axis=-1)
    bg3d = jnp.broadcast_to(grid3d, (B, H, W, 4))

    x = jnp.sum(bg3d * input1[..., 0:4], axis=3)
    y = jnp.sum(bg3d * input1[..., 4:8], axis=3)
    z = jnp.sum(bg3d * input1[..., 8:12], axis=3)

    r = jnp.sqrt(x ** 2 + y ** 2 + z ** 2) + 1e-5
    theta = jnp.arccos(z / r) / _HALF_PI - 1.0
    phi = jnp.arctan(y / (x + 1e-5)) + _PI * (x < 0).astype(jnp.float32) * (
        (y >= 0).astype(jnp.float32) - (y < 0).astype(jnp.float32))
    phi = phi / _PI

    u = input2.reshape(-1, 1, 1)
    out1 = jnp.arctan(jnp.tan(_HALF_PI * (phi + u))) / _HALF_PI
    return jnp.stack([theta, out1], axis=-1)


if __name__ == "__main__":
    B, H, W = 2, 16, 16
    key = jax.random.PRNGKey(0)
    k1, k2 = jax.random.split(key)
    input1 = jax.random.normal(k1, (B, H, W, 12), dtype=jnp.float32)
    input2 = jax.random.normal(k2, (B,), dtype=jnp.float32)

    out = dense_affine_3d_grid_gen_rotate(input1, input2)
    jax.block_until_ready(out)

    ref = _reference(input1, input2)
    assert out.shape == (B, H, W, 2)
    err = float(jnp.max(jnp.abs(out - ref)))
    assert err < 2e-4, f"max abs error {err}"
    print("KERNEL_OK")
</pallas_src>

<mosaic_0001>
module attributes {stable_mosaic.version = 11 : i64} {
  func.func @_grid_gen_kernel(%arg0: i32, %arg1: i32, %arg2: memref<2xf32, #tpu.memory_space<smem>>, %arg3: memref<1x12x256xf32, #tpu.memory_space<vmem>>, %arg4: memref<3x256xf32, #tpu.memory_space<vmem>>, %arg5: memref<1x2x256xf32, #tpu.memory_space<vmem>>) attributes {dimension_semantics = [#tpu.dimension_semantics<parallel>, #tpu.dimension_semantics<parallel>], iteration_bounds = array<i64: 2, 1>, scalar_prefetch = 0 : i64, scratch_operands = 0 : i64, tpu.core_type = #tpu.core_type<tc>, window_params = [{transform_indices = @transform_0, window_bounds = array<i64: 2>}, {transform_indices = @transform_1, window_bounds = array<i64: 1, 12, 256>}, {transform_indices = @transform_2, window_bounds = array<i64: 3, 256>}, {transform_indices = @transform_3, window_bounds = array<i64: 1, 2, 256>}]} {
    %0 = arith.index_cast %arg0 : i32 to index
    %1 = memref.load %arg2[%0] : memref<2xf32, #tpu.memory_space<smem>>
    %c0 = arith.constant 0 : index
    %c0_0 = arith.constant 0 : index
    %2 = vector.load %arg4[%c0, %c0_0] : memref<3x256xf32, #tpu.memory_space<vmem>>, vector<1x256xf32>
    %c1 = arith.constant 1 : index
    %c0_1 = arith.constant 0 : index
    %3 = vector.load %arg4[%c1, %c0_1] : memref<3x256xf32, #tpu.memory_space<vmem>>, vector<1x256xf32>
    %c2 = arith.constant 2 : index
    %c0_2 = arith.constant 0 : index
    %4 = vector.load %arg4[%c2, %c0_2] : memref<3x256xf32, #tpu.memory_space<vmem>>, vector<1x256xf32>
    %c0_3 = arith.constant 0 : index
    %c0_4 = arith.constant 0 : index
    %c0_5 = arith.constant 0 : index
    %5 = vector.load %arg3[%c0_3, %c0_4, %c0_5] : memref<1x12x256xf32, #tpu.memory_space<vmem>>, vector<1x1x256xf32>
    %6 = vector.shape_cast %5 : vector<1x1x256xf32> to vector<1x256xf32>
    %7 = arith.mulf %2, %6 : vector<1x256xf32>
    %c0_6 = arith.constant 0 : index
    %c1_7 = arith.constant 1 : index
    %c0_8 = arith.constant 0 : index
    %8 = vector.load %arg3[%c0_6, %c1_7, %c0_8] : memref<1x12x256xf32, #tpu.memory_space<vmem>>, vector<1x1x256xf32>
    %9 = vector.shape_cast %8 : vector<1x1x256xf32> to vector<1x256xf32>
    %10 = arith.mulf %3, %9 : vector<1x256xf32>
    %11 = arith.addf %7, %10 : vector<1x256xf32>
    %c0_9 = arith.constant 0 : index
    %c2_10 = arith.constant 2 : index
    %c0_11 = arith.constant 0 : index
    %12 = vector.load %arg3[%c0_9, %c2_10, %c0_11] : memref<1x12x256xf32, #tpu.memory_space<vmem>>, vector<1x1x256xf32>
    %13 = vector.shape_cast %12 : vector<1x1x256xf32> to vector<1x256xf32>
    %14 = arith.mulf %4, %13 : vector<1x256xf32>
    %15 = arith.addf %11, %14 : vector<1x256xf32>
    %c0_12 = arith.constant 0 : index
    %c3 = arith.constant 3 : index
    %c0_13 = arith.constant 0 : index
    %16 = vector.load %arg3[%c0_12, %c3, %c0_13] : memref<1x12x256xf32, #tpu.memory_space<vmem>>, vector<1x1x256xf32>
    %17 = vector.shape_cast %16 : vector<1x1x256xf32> to vector<1x256xf32>
    %18 = arith.addf %15, %17 : vector<1x256xf32>
    %c0_14 = arith.constant 0 : index
    %c4 = arith.constant 4 : index
    %c0_15 = arith.constant 0 : index
    %19 = vector.load %arg3[%c0_14, %c4, %c0_15] : memref<1x12x256xf32, #tpu.memory_space<vmem>>, vector<1x1x256xf32>
    %20 = vector.shape_cast %19 : vector<1x1x256xf32> to vector<1x256xf32>
    %21 = arith.mulf %2, %20 : vector<1x256xf32>
    %c0_16 = arith.constant 0 : index
    %c5 = arith.constant 5 : index
    %c0_17 = arith.constant 0 : index
    %22 = vector.load %arg3[%c0_16, %c5, %c0_17] : memref<1x12x256xf32, #tpu.memory_space<vmem>>, vector<1x1x256xf32>
    %23 = vector.shape_cast %22 : vector<1x1x256xf32> to vector<1x256xf32>
    %24 = arith.mulf %3, %23 : vector<1x256xf32>
    %25 = arith.addf %21, %24 : vector<1x256xf32>
    %c0_18 = arith.constant 0 : index
    %c6 = arith.constant 6 : index
    %c0_19 = arith.constant 0 : index
    %26 = vector.load %arg3[%c0_18, %c6, %c0_19] : memref<1x12x256xf32, #tpu.memory_space<vmem>>, vector<1x1x256xf32>
    %27 = vector.shape_cast %26 : vector<1x1x256xf32> to vector<1x256xf32>
    %28 = arith.mulf %4, %27 : vector<1x256xf32>
    %29 = arith.addf %25, %28 : vector<1x256xf32>
    %c0_20 = arith.constant 0 : index
    %c7 = arith.constant 7 : index
    %c0_21 = arith.constant 0 : index
    %30 = vector.load %arg3[%c0_20, %c7, %c0_21] : memref<1x12x256xf32, #tpu.memory_space<vmem>>, vector<1x1x256xf32>
    %31 = vector.shape_cast %30 : vector<1x1x256xf32> to vector<1x256xf32>
    %32 = arith.addf %29, %31 : vector<1x256xf32>
    %c0_22 = arith.constant 0 : index
    %c8 = arith.constant 8 : index
    %c0_23 = arith.constant 0 : index
    %33 = vector.load %arg3[%c0_22, %c8, %c0_23] : memref<1x12x256xf32, #tpu.memory_space<vmem>>, vector<1x1x256xf32>
    %34 = vector.shape_cast %33 : vector<1x1x256xf32> to vector<1x256xf32>
    %35 = arith.mulf %2, %34 : vector<1x256xf32>
    %c0_24 = arith.constant 0 : index
    %c9 = arith.constant 9 : index
    %c0_25 = arith.constant 0 : index
    %36 = vector.load %arg3[%c0_24, %c9, %c0_25] : memref<1x12x256xf32, #tpu.memory_space<vmem>>, vector<1x1x256xf32>
    %37 = vector.shape_cast %36 : vector<1x1x256xf32> to vector<1x256xf32>
    %38 = arith.mulf %3, %37 : vector<1x256xf32>
    %39 = arith.addf %35, %38 : vector<1x256xf32>
    %c0_26 = arith.constant 0 : index
    %c10 = arith.constant 10 : index
    %c0_27 = arith.constant 0 : index
    %40 = vector.load %arg3[%c0_26, %c10, %c0_27] : memref<1x12x256xf32, #tpu.memory_space<vmem>>, vector<1x1x256xf32>
    %41 = vector.shape_cast %40 : vector<1x1x256xf32> to vector<1x256xf32>
    %42 = arith.mulf %4, %41 : vector<1x256xf32>
    %43 = arith.addf %39, %42 : vector<1x256xf32>
    %c0_28 = arith.constant 0 : index
    %c11 = arith.constant 11 : index
    %c0_29 = arith.constant 0 : index
    %44 = vector.load %arg3[%c0_28, %c11, %c0_29] : memref<1x12x256xf32, #tpu.memory_space<vmem>>, vector<1x1x256xf32>
    %45 = vector.shape_cast %44 : vector<1x1x256xf32> to vector<1x256xf32>
    %46 = arith.addf %43, %45 : vector<1x256xf32>
    %47 = arith.mulf %18, %18 : vector<1x256xf32>
    %48 = arith.mulf %32, %32 : vector<1x256xf32>
    %49 = arith.addf %47, %48 : vector<1x256xf32>
    %50 = arith.mulf %46, %46 : vector<1x256xf32>
    %51 = arith.addf %49, %50 : vector<1x256xf32>
    %52 = math.sqrt %51 : vector<1x256xf32>
    %cst = arith.constant 9.99999974E-6 : f32
    %53 = vector.broadcast %cst : f32 to vector<1x256xf32>
    %54 = arith.addf %52, %53 : vector<1x256xf32>
    %55 = arith.divf %46, %54 : vector<1x256xf32>
    %cst_30 = arith.constant 1.000000e+00 : f32
    %56 = vector.broadcast %cst_30 : f32 to vector<1x256xf32>
    %57 = arith.subf %56, %55 : vector<1x256xf32>
    %cst_31 = arith.constant 1.000000e+00 : f32
    %58 = vector.broadcast %cst_31 : f32 to vector<1x256xf32>
    %59 = arith.addf %58, %55 : vector<1x256xf32>
    %60 = arith.divf %57, %59 : vector<1x256xf32>
    %61 = math.sqrt %60 : vector<1x256xf32>
    %cst_32 = arith.constant 0.000000e+00 : f32
    %62 = vector.broadcast %cst_32 : f32 to vector<1x256xf32>
    %63 = arith.cmpf olt, %61, %62 : vector<1x256xf32>
    %cst_33 = arith.constant -1.000000e+00 : f32
    %cst_34 = arith.constant 1.000000e+00 : f32
    %64 = vector.broadcast %cst_33 : f32 to vector<1x256xf32>
    %65 = vector.broadcast %cst_34 : f32 to vector<1x256xf32>
    %66 = arith.select %63, %64, %65 : vector<1x256xi1>, vector<1x256xf32>
    %67 = math.absf %61 : vector<1x256xf32>
    %cst_35 = arith.constant 2.41421366 : f32
    %68 = vector.broadcast %cst_35 : f32 to vector<1x256xf32>
    %69 = arith.cmpf ogt, %67, %68 : vector<1x256xf32>
    %cst_36 = arith.constant dense<true> : vector<1x256xi1>
    %70 = arith.xori %69, %cst_36 : vector<1x256xi1>
    %cst_37 = arith.constant 0.414213568 : f32
    %71 = vector.broadcast %cst_37 : f32 to vector<1x256xf32>
    %72 = arith.cmpf ogt, %67, %71 : vector<1x256xf32>
    %73 = arith.andi %70, %72 : vector<1x256xi1>
    %cst_38 = arith.constant 1.000000e+00 : f32
    %74 = vector.broadcast %cst_38 : f32 to vector<1x256xf32>
    %75 = arith.select %69, %67, %74 : vector<1x256xi1>, vector<1x256xf32>
    %cst_39 = arith.constant -1.000000e+00 : f32
    %76 = vector.broadcast %cst_39 : f32 to vector<1x256xf32>
    %77 = arith.divf %76, %75 : vector<1x256xf32>
    %cst_40 = arith.constant 1.000000e+00 : f32
    %78 = vector.broadcast %cst_40 : f32 to vector<1x256xf32>
    %79 = arith.subf %67, %78 : vector<1x256xf32>
    %cst_41 = arith.constant 1.000000e+00 : f32
    %80 = vector.broadcast %cst_41 : f32 to vector<1x256xf32>
    %81 = arith.addf %67, %80 : vector<1x256xf32>
    %82 = arith.divf %79, %81 : vector<1x256xf32>
    %83 = arith.select %73, %82, %67 : vector<1x256xi1>, vector<1x256xf32>
    %84 = arith.select %69, %77, %83 : vector<1x256xi1>, vector<1x256xf32>
    %cst_42 = arith.constant 0.785398185 : f32
    %cst_43 = arith.constant 0.000000e+00 : f32
    %85 = vector.broadcast %cst_42 : f32 to vector<1x256xf32>
    %86 = vector.broadcast %cst_43 : f32 to vector<1x256xf32>
    %87 = arith.select %73, %85, %86 : vector<1x256xi1>, vector<1x256xf32>
    %cst_44 = arith.constant 1.57079637 : f32
    %88 = vector.broadcast %cst_44 : f32 to vector<1x256xf32>
    %89 = arith.select %69, %88, %87 : vector<1x256xi1>, vector<1x256xf32>
    %90 = arith.mulf %84, %84 : vector<1x256xf32>
    %cst_45 = arith.constant 0.0805374458 : f32
    %91 = vector.broadcast %cst_45 : f32 to vector<1x256xf32>
    %92 = arith.mulf %91, %90 : vector<1x256xf32>
    %cst_46 = arith.constant 0.138776854 : f32
    %93 = vector.broadcast %cst_46 : f32 to vector<1x256xf32>
    %94 = arith.subf %92, %93 : vector<1x256xf32>
    %95 = arith.mulf %94, %90 : vector<1x256xf32>
    %cst_47 = arith.constant 0.199777111 : f32
    %96 = vector.broadcast %cst_47 : f32 to vector<1x256xf32>
    %97 = arith.addf %95, %96 : vector<1x256xf32>
    %98 = arith.mulf %97, %90 : vector<1x256xf32>
    %cst_48 = arith.constant 0.333329499 : f32
    %99 = vector.broadcast %cst_48 : f32 to vector<1x256xf32>
    %100 = arith.subf %98, %99 : vector<1x256xf32>
    %101 = arith.mulf %100, %90 : vector<1x256xf32>
    %102 = arith.mulf %101, %84 : vector<1x256xf32>
    %103 = arith.addf %89, %102 : vector<1x256xf32>
    %104 = arith.addf %103, %84 : vector<1x256xf32>
    %105 = arith.mulf %66, %104 : vector<1x256xf32>
    %cst_49 = arith.constant 2.000000e+00 : f32
    %106 = vector.broadcast %cst_49 : f32 to vector<1x256xf32>
    %107 = arith.mulf %106, %105 : vector<1x256xf32>
    %cst_50 = arith.constant 0.636619746 : f32
    %108 = vector.broadcast %cst_50 : f32 to vector<1x256xf32>
    %109 = arith.mulf %107, %108 : vector<1x256xf32>
    %cst_51 = arith.constant 1.000000e+00 : f32
    %110 = vector.broadcast %cst_51 : f32 to vector<1x256xf32>
    %111 = arith.subf %109, %110 : vector<1x256xf32>
    %cst_52 = arith.constant 9.99999974E-6 : f32
    %112 = vector.broadcast %cst_52 : f32 to vector<1x256xf32>
    %113 = arith.addf %18, %112 : vector<1x256xf32>
    %114 = arith.divf %32, %113 : vector<1x256xf32>
    %cst_53 = arith.constant 0.000000e+00 : f32
    %115 = vector.broadcast %cst_53 : f32 to vector<1x256xf32>
    %116 = arith.cmpf olt, %114, %115 : vector<1x256xf32>
    %cst_54 = arith.constant -1.000000e+00 : f32
    %cst_55 = arith.constant 1.000000e+00 : f32
    %117 = vector.broadcast %cst_54 : f32 to vector<1x256xf32>
    %118 = vector.broadcast %cst_55 : f32 to vector<1x256xf32>
    %119 = arith.select %116, %117, %118 : vector<1x256xi1>, vector<1x256xf32>
    %120 = math.absf %114 : vector<1x256xf32>
    %cst_56 = arith.constant 2.41421366 : f32
    %121 = vector.broadcast %cst_56 : f32 to vector<1x256xf32>
    %122 = arith.cmpf ogt, %120, %121 : vector<1x256xf32>
    %cst_57 = arith.constant dense<true> : vector<1x256xi1>
    %123 = arith.xori %122, %cst_57 : vector<1x256xi1>
    %cst_58 = arith.constant 0.414213568 : f32
    %124 = vector.broadcast %cst_58 : f32 to vector<1x256xf32>
    %125 = arith.cmpf ogt, %120, %124 : vector<1x256xf32>
    %126 = arith.andi %123, %125 : vector<1x256xi1>
    %cst_59 = arith.constant 1.000000e+00 : f32
    %127 = vector.broadcast %cst_59 : f32 to vector<1x256xf32>
    %128 = arith.select %122, %120, %127 : vector<1x256xi1>, vector<1x256xf32>
    %cst_60 = arith.constant -1.000000e+00 : f32
    %129 = vector.broadcast %cst_60 : f32 to vector<1x256xf32>
    %130 = arith.divf %129, %128 : vector<1x256xf32>
    %cst_61 = arith.constant 1.000000e+00 : f32
    %131 = vector.broadcast %cst_61 : f32 to vector<1x256xf32>
    %132 = arith.subf %120, %131 : vector<1x256xf32>
    %cst_62 = arith.constant 1.000000e+00 : f32
    %133 = vector.broadcast %cst_62 : f32 to vector<1x256xf32>
    %134 = arith.addf %120, %133 : vector<1x256xf32>
    %135 = arith.divf %132, %134 : vector<1x256xf32>
    %136 = arith.select %126, %135, %120 : vector<1x256xi1>, vector<1x256xf32>
    %137 = arith.select %122, %130, %136 : vector<1x256xi1>, vector<1x256xf32>
    %cst_63 = arith.constant 0.785398185 : f32
    %cst_64 = arith.constant 0.000000e+00 : f32
    %138 = vector.broadcast %cst_63 : f32 to vector<1x256xf32>
    %139 = vector.broadcast %cst_64 : f32 to vector<1x256xf32>
    %140 = arith.select %126, %138, %139 : vector<1x256xi1>, vector<1x256xf32>
    %cst_65 = arith.constant 1.57079637 : f32
    %141 = vector.broadcast %cst_65 : f32 to vector<1x256xf32>
    %142 = arith.select %122, %141, %140 : vector<1x256xi1>, vector<1x256xf32>
    %143 = arith.mulf %137, %137 : vector<1x256xf32>
    %cst_66 = arith.constant 0.0805374458 : f32
    %144 = vector.broadcast %cst_66 : f32 to vector<1x256xf32>
    %145 = arith.mulf %144, %143 : vector<1x256xf32>
    %cst_67 = arith.constant 0.138776854 : f32
    %146 = vector.broadcast %cst_67 : f32 to vector<1x256xf32>
    %147 = arith.subf %145, %146 : vector<1x256xf32>
    %148 = arith.mulf %147, %143 : vector<1x256xf32>
    %cst_68 = arith.constant 0.199777111 : f32
    %149 = vector.broadcast %cst_68 : f32 to vector<1x256xf32>
    %150 = arith.addf %148, %149 : vector<1x256xf32>
    %151 = arith.mulf %150, %143 : vector<1x256xf32>
    %cst_69 = arith.constant 0.333329499 : f32
    %152 = vector.broadcast %cst_69 : f32 to vector<1x256xf32>
    %153 = arith.subf %151, %152 : vector<1x256xf32>
    %154 = arith.mulf %153, %143 : vector<1x256xf32>
    %155 = arith.mulf %154, %137 : vector<1x256xf32>
    %156 = arith.addf %142, %155 : vector<1x256xf32>
    %157 = arith.addf %156, %137 : vector<1x256xf32>
    %158 = arith.mulf %119, %157 : vector<1x256xf32>
    %cst_70 = arith.constant 0.000000e+00 : f32
    %159 = vector.broadcast %cst_70 : f32 to vector<1x256xf32>
    %160 = arith.cmpf olt, %18, %159 : vector<1x256xf32>
    %cst_71 = arith.constant 0.000000e+00 : f32
    %161 = vector.broadcast %cst_71 : f32 to vector<1x256xf32>
    %162 = arith.cmpf oge, %32, %161 : vector<1x256xf32>
    %cst_72 = arith.constant 3.14159274 : f32
    %cst_73 = arith.constant -3.14159274 : f32
    %163 = vector.broadcast %cst_72 : f32 to vector<1x256xf32>
    %164 = vector.broadcast %cst_73 : f32 to vector<1x256xf32>
    %165 = arith.select %162, %163, %164 : vector<1x256xi1>, vector<1x256xf32>
    %cst_74 = arith.constant 0.000000e+00 : f32
    %166 = vector.broadcast %cst_74 : f32 to vector<1x256xf32>
    %167 = arith.select %160, %165, %166 : vector<1x256xi1>, vector<1x256xf32>
    %168 = arith.addf %158, %167 : vector<1x256xf32>
    %cst_75 = arith.constant 0.318309873 : f32
    %169 = vector.broadcast %cst_75 : f32 to vector<1x256xf32>
    %170 = arith.mulf %168, %169 : vector<1x256xf32>
    %171 = vector.broadcast %1 : f32 to vector<1x256xf32>
    %172 = arith.addf %170, %171 : vector<1x256xf32>
    %cst_76 = arith.constant 1.57079637 : f32
    %173 = vector.broadcast %cst_76 : f32 to vector<1x256xf32>
    %174 = arith.mulf %173, %172 : vector<1x256xf32>
    %175 = math.sin %174 : vector<1x256xf32>
    %176 = math.cos %174 : vector<1x256xf32>
    %177 = arith.divf %175, %176 : vector<1x256xf32>
    %cst_77 = arith.constant 0.000000e+00 : f32
    %178 = vector.broadcast %cst_77 : f32 to vector<1x256xf32>
    %179 = arith.cmpf olt, %177, %178 : vector<1x256xf32>
    %cst_78 = arith.constant -1.000000e+00 : f32
    %cst_79 = arith.constant 1.000000e+00 : f32
    %180 = vector.broadcast %cst_78 : f32 to vector<1x256xf32>
    %181 = vector.broadcast %cst_79 : f32 to vector<1x256xf32>
    %182 = arith.select %179, %180, %181 : vector<1x256xi1>, vector<1x256xf32>
    %183 = math.absf %177 : vector<1x256xf32>
    %cst_80 = arith.constant 2.41421366 : f32
    %184 = vector.broadcast %cst_80 : f32 to vector<1x256xf32>
    %185 = arith.cmpf ogt, %183, %184 : vector<1x256xf32>
    %cst_81 = arith.constant dense<true> : vector<1x256xi1>
    %186 = arith.xori %185, %cst_81 : vector<1x256xi1>
    %cst_82 = arith.constant 0.414213568 : f32
    %187 = vector.broadcast %cst_82 : f32 to vector<1x256xf32>
    %188 = arith.cmpf ogt, %183, %187 : vector<1x256xf32>
    %189 = arith.andi %186, %188 : vector<1x256xi1>
    %cst_83 = arith.constant 1.000000e+00 : f32
    %190 = vector.broadcast %cst_83 : f32 to vector<1x256xf32>
    %191 = arith.select %185, %183, %190 : vector<1x256xi1>, vector<1x256xf32>
    %cst_84 = arith.constant -1.000000e+00 : f32
    %192 = vector.broadcast %cst_84 : f32 to vector<1x256xf32>
    %193 = arith.divf %192, %191 : vector<1x256xf32>
    %cst_85 = arith.constant 1.000000e+00 : f32
    %194 = vector.broadcast %cst_85 : f32 to vector<1x256xf32>
    %195 = arith.subf %183, %194 : vector<1x256xf32>
    %cst_86 = arith.constant 1.000000e+00 : f32
    %196 = vector.broadcast %cst_86 : f32 to vector<1x256xf32>
    %197 = arith.addf %183, %196 : vector<1x256xf32>
    %198 = arith.divf %195, %197 : vector<1x256xf32>
    %199 = arith.select %189, %198, %183 : vector<1x256xi1>, vector<1x256xf32>
    %200 = arith.select %185, %193, %199 : vector<1x256xi1>, vector<1x256xf32>
    %cst_87 = arith.constant 0.785398185 : f32
    %cst_88 = arith.constant 0.000000e+00 : f32
    %201 = vector.broadcast %cst_87 : f32 to vector<1x256xf32>
    %202 = vector.broadcast %cst_88 : f32 to vector<1x256xf32>
    %203 = arith.select %189, %201, %202 : vector<1x256xi1>, vector<1x256xf32>
    %cst_89 = arith.constant 1.57079637 : f32
    %204 = vector.broadcast %cst_89 : f32 to vector<1x256xf32>
    %205 = arith.select %185, %204, %203 : vector<1x256xi1>, vector<1x256xf32>
    %206 = arith.mulf %200, %200 : vector<1x256xf32>
    %cst_90 = arith.constant 0.0805374458 : f32
    %207 = vector.broadcast %cst_90 : f32 to vector<1x256xf32>
    %208 = arith.mulf %207, %206 : vector<1x256xf32>
    %cst_91 = arith.constant 0.138776854 : f32
    %209 = vector.broadcast %cst_91 : f32 to vector<1x256xf32>
    %210 = arith.subf %208, %209 : vector<1x256xf32>
    %211 = arith.mulf %210, %206 : vector<1x256xf32>
    %cst_92 = arith.constant 0.199777111 : f32
    %212 = vector.broadcast %cst_92 : f32 to vector<1x256xf32>
    %213 = arith.addf %211, %212 : vector<1x256xf32>
    %214 = arith.mulf %213, %206 : vector<1x256xf32>
    %cst_93 = arith.constant 0.333329499 : f32
    %215 = vector.broadcast %cst_93 : f32 to vector<1x256xf32>
    %216 = arith.subf %214, %215 : vector<1x256xf32>
    %217 = arith.mulf %216, %206 : vector<1x256xf32>
    %218 = arith.mulf %217, %200 : vector<1x256xf32>
    %219 = arith.addf %205, %218 : vector<1x256xf32>
    %220 = arith.addf %219, %200 : vector<1x256xf32>
    %221 = arith.mulf %182, %220 : vector<1x256xf32>
    %cst_94 = arith.constant 0.636619746 : f32
    %222 = vector.broadcast %cst_94 : f32 to vector<1x256xf32>
    %223 = arith.mulf %221, %222 : vector<1x256xf32>
    %c0_95 = arith.constant 0 : index
    %c0_96 = arith.constant 0 : index
    %c0_97 = arith.constant 0 : index
    %224 = vector.load %arg5[%c0_95, %c0_96, %c0_97] : memref<1x2x256xf32, #tpu.memory_space<vmem>>, vector<1x1x256xf32>
    %225 = vector.shape_cast %224 : vector<1x1x256xf32> to vector<1x256xf32>
    %226 = vector.shape_cast %111 : vector<1x256xf32> to vector<1x1x256xf32>
    tpu.vector_store %arg5[%c0_95, %c0_96, %c0_97], %226 {strides = array<i32>} : memref<1x2x256xf32, #tpu.memory_space<vmem>>, vector<1x1x256xf32>,
    %c0_98 = arith.constant 0 : index
    %c1_99 = arith.constant 1 : index
    %c0_100 = arith.constant 0 : index
    %227 = vector.load %arg5[%c0_98, %c1_99, %c0_100] : memref<1x2x256xf32, #tpu.memory_space<vmem>>, vector<1x1x256xf32>
    %228 = vector.shape_cast %227 : vector<1x1x256xf32> to vector<1x256xf32>
    %229 = vector.shape_cast %223 : vector<1x256xf32> to vector<1x1x256xf32>
    tpu.vector_store %arg5[%c0_98, %c1_99, %c0_100], %229 {strides = array<i32>} : memref<1x2x256xf32, #tpu.memory_space<vmem>>, vector<1x1x256xf32>,
    return
  }
  func.func @transform_0(%arg0: i32, %arg1: i32) -> i32 {
    %c0_i32 = arith.constant 0 : i32
    %c0_i32_0 = arith.constant 0 : i32
    return %c0_i32 : i32
  }
  func.func @transform_1(%arg0: i32, %arg1: i32) -> (i32, i32, i32) {
    %c0_i32 = arith.constant 0 : i32
    %c0_i32_0 = arith.constant 0 : i32
    return %arg0, %c0_i32, %arg1 : i32, i32, i32
  }
  func.func @transform_2(%arg0: i32, %arg1: i32) -> (i32, i32) {
    %c0_i32 = arith.constant 0 : i32
    %c0_i32_0 = arith.constant 0 : i32
    return %c0_i32, %arg1 : i32, i32
  }
  func.func @transform_3(%arg0: i32, %arg1: i32) -> (i32, i32, i32) {
    %c0_i32 = arith.constant 0 : i32
    %c0_i32_0 = arith.constant 0 : i32
    return %arg0, %c0_i32, %arg1 : i32, i32, i32
  }
}

</mosaic_0001>

<llo_original>
// kernel: tpu_custom_call.1
$region0: #{tpu_custom_call.1}
  #allocation0 [shape = 'u32[]', space=smem, size = 0x4, offset = 0x4, fixed_abs, tag = 'smem constant byte address 0x4 - core index']
  #allocation1 [shape = 'u32[144,128]{1,0:T(1,128)}', space=vmem, size = 0x12000, scoped, tag = 'internal scratch']
  %s0 = inlined_call_operand.vmem [shape: f32[2], index: 0, kind: input, shape index: {}]
  %s1 = inlined_call_operand.vmem [shape: f32[2,12,256], index: 1, kind: input, shape index: {}]
  %s2 = inlined_call_operand.vmem [shape: f32[3,256], index: 2, kind: input, shape index: {}]
  %s3 = inlined_call_operand.hbm [shape: f32[2,2,256], index: 3, kind: output, shape index: {}]
  %s4 = sld [smem:[#allocation0]]
  $region49: #{tpu_custom_call.1} parent=0
    _
  %s6 = ssub.s32 1, %s4
  %s7 = scalar_select 0, %s6, %s4
  $region1: #{tpu_custom_call.1} parent=0
    #allocation2 [shape = 'u8[512]{0}', space=smem, size = 0x200, scoped, tag = 'input window, operand 0, single buffered']
    #allocation3 [shape = 's32[2]{0}', space=sflag, size = 0x8, scoped, tag = 'scoped memory for tpu_custom_call.1']
    #allocation4 [shape = 's32[2]{0}', space=sflag, size = 0x8, scoped, tag = 'scoped memory for tpu_custom_call.1']
    #allocation5 [shape = 'u8[4096]{0}', space=vmem, size = 0x1000, scoped, tag = 'output window, operand 0']
    %8 = vsyncpa [#allocation4], 0
    %9 = vsyncpa [#allocation3], 0
    %s10 = scalar_lea.sflag [#allocation3], 1
    %11 = vsyncpa %s10, 0
    loop: start=0, step=1, limit=4
    $region2: #{tpu_custom_call.1} parent=1 // loop_pre_header
      _
    $region3: #{tpu_custom_call.1} parent=1 // loop_header
      %s13 = sphi 0, %s17
      %p14 = scmp.ge.s32.totalorder %s13, 4
      %s20 = sphi 0, %s32
      %s21 = sphi 0, %s28
      %s22 = sphi 0, %s20
      %s23 = sphi 0, %s21
      %s24 = sphi 0, %s22
      %s25 = sphi 0, %s23
      %s33 = sphi 0, %s33
      %s35 = sphi 0, %s33
      %s36 = sphi 0, %s35
      %s50 = sphi 0, %s36
      %s58 = sphi 0, %s60
      %s61 = sphi 0, %s58
      %s62 = sphi 0, %s61
      %s78 = sphi 0, %s62
      %s84 = sphi 0, %s86
      %s87 = sphi 0, %s84
      %s88 = sphi 0, %s87
      %s104 = sphi 0, %s88
      %s112 = sphi 0, %s114
      %s115 = sphi 0, %s112
      %s116 = sphi 0, %s115
      %s132 = sphi 0, %s116
    $region4: #{tpu_custom_call.1} parent=1 // loop_header_branch
      %16 = sbr.rel (%p14) target = $region8
    $region5: #{tpu_custom_call.1} parent=1 // loop_body
      %s18 = ssub.s32 %s13, 1
      %s19 = ssub.s32 %s13, 2
      %s26 = sadd.s32 1, %s21
      %p27 = scmp.ge.s32.totalorder %s26, 1
      %s28 = scalar_select %p27, 0, %s26
      %s29 = sadd.s32 1, %s20
      %s30 = scalar_select %p27, %s29, %s20
      %p31 = scmp.ge.s32.totalorder %s30, 2
      %s32 = scalar_select %p31, 0, %s30
      %s34 = sadd.s32 %s33, 1
      %p37 = scmp.eq.s32.totalorder %s13, 1
      %p38 = scmp.ne.s32.totalorder %s33, %s35
      %p39 = scmp.eq.s32.totalorder %s13, 0
      %p40 = por %p38, %p39
      %p41 = scmp.ne.s32.totalorder %s33, %s35
      %p42 = scmp.eq.s32.totalorder %s18, 1
      %p43 = por %p41, %p42
      %p44 = scmp.ne.s32.totalorder %s35, %s36
      %p45 = scmp.eq.s32.totalorder %s18, 0
      %p46 = por %p44, %p45
      %p47 = scmp.ne.s32.totalorder %s35, %s36
      %p48 = scmp.eq.s32.totalorder %s19, 1
      %p49 = por %p47, %p48
      %p51 = scmp.ne.s32.totalorder %s36, %s50
      %p52 = scmp.eq.s32.totalorder %s19, 0
      %p53 = por %p51, %p52
      %s54 = ssub.s32 %s20, %s32
      %s55 = ssub.s32 %s21, %s28
      %s56 = sor.u32 %s54, %s55
      %p57 = scmp.eq.s32.totalorder %s56, 0
      %s59 = sadd.s32 %s58, 1
      %s60 = scalar_select %p57, %s58, %s59
      %p63 = pneg %p57
      %p64 = scmp.eq.s32.totalorder %s13, 1
      %p65 = por %p63, %p64
      %p66 = scmp.ne.s32.totalorder %s58, %s61
      %p67 = scmp.eq.s32.totalorder %s13, 0
      %p68 = por %p66, %p67
      %p69 = scmp.ne.s32.totalorder %s58, %s61
      %p70 = scmp.eq.s32.totalorder %s18, 1
      %p71 = por %p69, %p70
      %p72 = scmp.ne.s32.totalorder %s61, %s62
      %p73 = scmp.eq.s32.totalorder %s18, 0
      %p74 = por %p72, %p73
      %p75 = scmp.ne.s32.totalorder %s61, %s62
      %p76 = scmp.eq.s32.totalorder %s19, 1
      %p77 = por %p75, %p76
      %p79 = scmp.ne.s32.totalorder %s62, %s78
      %p80 = scmp.eq.s32.totalorder %s19, 0
      %p81 = por %p79, %p80
      %s82 = ssub.s32 %s21, %s28
      %p83 = scmp.eq.s32.totalorder %s82, 0
      %s85 = sadd.s32 %s84, 1
      %s86 = scalar_select %p83, %s84, %s85
      %p89 = pneg %p83
      %p90 = scmp.eq.s32.totalorder %s13, 1
      %p91 = por %p89, %p90
      %p92 = scmp.ne.s32.totalorder %s84, %s87
      %p93 = scmp.eq.s32.totalorder %s13, 0
      %p94 = por %p92, %p93
      %p95 = scmp.ne.s32.totalorder %s84, %s87
      %p96 = scmp.eq.s32.totalorder %s18, 1
      %p97 = por %p95, %p96
      %p98 = scmp.ne.s32.totalorder %s87, %s88
      %p99 = scmp.eq.s32.totalorder %s18, 0
      %p100 = por %p98, %p99
      %p101 = scmp.ne.s32.totalorder %s87, %s88
      %p102 = scmp.eq.s32.totalorder %s19, 1
      %p103 = por %p101, %p102
      %p105 = scmp.ne.s32.totalorder %s88, %s104
      %p106 = scmp.eq.s32.totalorder %s19, 0
      %p107 = por %p105, %p106
      %s108 = ssub.s32 %s20, %s32
      %s109 = ssub.s32 %s21, %s28
      %s110 = sor.u32 %s108, %s109
      %p111 = scmp.eq.s32.totalorder %s110, 0
      %s113 = sadd.s32 %s112, 1
      %s114 = scalar_select %p111, %s112, %s113
      %p117 = pneg %p111
      %p118 = scmp.eq.s32.totalorder %s13, 1
      %p119 = por %p117, %p118
      %p120 = scmp.ne.s32.totalorder %s112, %s115
      %p121 = scmp.eq.s32.totalorder %s13, 0
      %p122 = por %p120, %p121
      %p123 = scmp.ne.s32.totalorder %s112, %s115
      %p124 = scmp.eq.s32.totalorder %s18, 1
      %p125 = por %p123, %p124
      %p126 = scmp.ne.s32.totalorder %s115, %s116
      %p127 = scmp.eq.s32.totalorder %s18, 0
      %p128 = por %p126, %p127
      %p129 = scmp.ne.s32.totalorder %s115, %s116
      %p130 = scmp.eq.s32.totalorder %s19, 1
      %p131 = por %p129, %p130
      %p133 = scmp.ne.s32.totalorder %s116, %s132
      %p134 = scmp.eq.s32.totalorder %s19, 0
      %p135 = por %p133, %p134
      %p136 = scmp.le.s32.totalorder 1, %s13
      %p137 = scmp.lt.s32.totalorder %s13, 3
      %p138 = pnand %p136, %p137
      %p139 = pneg %p138
      // Predicated region
      $region9: #{tpu_custom_call.1} parent=5 // pred_check
        _
      $region10: #{tpu_custom_call.1} parent=5 // pred_check_branch
        %141 = sbr.rel (%p138) target = $region12
      $region11: #{tpu_custom_call.1} parent=5 // pred_region
        %s142 = ssub.s32 %s13, 1
        // Predicated region
        $region13: #{tpu_custom_call.1} parent=11 // pred_check
          %p143 = pneg %p46
        $region14: #{tpu_custom_call.1} parent=11 // pred_check_branch
          %145 = sbr.rel (%p143) target = $region16
        $region15: #{tpu_custom_call.1} parent=11 // pred_region
          %s147 = ssub.s32 16, 16
          %148 = vsyncadd [#allocation4], %s147
          %s150 = sshll.u32 %s0, 4
          %s151 = int_to_ptr.vmem [resolvable:$true] %s150
          %153 = dma.vmem_to_smem %s151, 16, [#allocation2], [#allocation4]
        $region16: #{tpu_custom_call.1} parent=11 // pred_fallthru
          _
        // Predicated region
        $region17: #{tpu_custom_call.1} parent=11 // pred_check
          %p154 = pneg %p100
        $region18: #{tpu_custom_call.1} parent=11 // pred_check_branch
          %156 = sbr.rel (%p154) target = $region20
        $region19: #{tpu_custom_call.1} parent=11 // pred_region
          %s157 = smul.u32 2, %s23
          %p158 = scmp.lt.s32.totalorder %s157, 1
          %s159 = scalar_select %p158, %s157, 1
          %s160 = smul.addr %s159, 4
          %s161 = scalar_lea.vmem %s2, %s160
          %s162 = smul.u32 2, %s23
        $region20: #{tpu_custom_call.1} parent=11 // pred_fallthru
          _
      $region12: #{tpu_custom_call.1} parent=5 // pred_fallthru
        _
      %p163 = scmp.lt.s32.totalorder %s13, 2
      // Predicated region
      $region21: #{tpu_custom_call.1} parent=5 // pred_check
        %p164 = pneg %p163
      $region22: #{tpu_custom_call.1} parent=5 // pred_check_branch
        %166 = sbr.rel (%p164) target = $region24
      $region23: #{tpu_custom_call.1} parent=5 // pred_region
        // Predicated region
        $region25: #{tpu_custom_call.1} parent=23 // pred_check
          %p167 = pneg %p68
        $region26: #{tpu_custom_call.1} parent=23 // pred_check_branch
          %169 = sbr.rel (%p167) target = $region28
        $region27: #{tpu_custom_call.1} parent=23 // pred_region
          %s170 = smul.u32 2, %s21
          %p171 = scmp.lt.s32.totalorder %s20, 1
          %s172 = scalar_select %p171, %s20, 1
          %p173 = scmp.lt.s32.totalorder %s170, 1
          %s174 = scalar_select %p173, %s170, 1
          %s175 = smul.addr %s172, 4
          %s176 = sadd.s32 %s174, %s175
          %s177 = smul.addr %s176, 8
          %s178 = scalar_lea.vmem %s1, %s177
          %s179 = smul.u32 2, %s21
        $region28: #{tpu_custom_call.1} parent=23 // pred_fallthru
          _
      $region24: #{tpu_custom_call.1} parent=5 // pred_fallthru
        _
      %p180 = scmp.le.s32.totalorder 1, %s13
      %p181 = scmp.lt.s32.totalorder %s13, 3
      %p182 = pnand %p180, %p181
      %p183 = pneg %p182
      // Predicated region
      $region29: #{tpu_custom_call.1} parent=5 // pred_check
        _
      $region30: #{tpu_custom_call.1} parent=5 // pred_check_branch
        %185 = sbr.rel (%p182) target = $region32
      $region31: #{tpu_custom_call.1} parent=5 // pred_region
        %s186 = ssub.s32 %s13, 1
        // Predicated region
        $region33: #{tpu_custom_call.1} parent=31 // pred_check
          %p187 = pneg %p46
        $region34: #{tpu_custom_call.1} parent=31 // pred_check_branch
          %189 = sbr.rel (%p187) target = $region36
        $region35: #{tpu_custom_call.1} parent=31 // pred_region
          %190 = dma.done [#allocation4], 16
        $region36: #{tpu_custom_call.1} parent=31 // pred_fallthru
          _
        %191 = sfence
        %p192 = pneg %p46
        %p193 = pneg %p43
        %s194 = smul.u32 2, %s23
        %p195 = scmp.lt.s32.totalorder %s22, 1
        %s196 = scalar_select %p195, %s22, 1
        %p197 = scmp.lt.s32.totalorder %s194, 1
        %s198 = scalar_select %p197, %s194, 1
        %s199 = smul.addr %s196, 4
        %s200 = sadd.s32 %s198, %s199
        %s201 = smul.addr %s200, 8
        %s202 = scalar_lea.vmem %s1, %s201
        %p203 = pneg %p74
        %p204 = pneg %p71
        %s205 = smul.u32 2, %s23
        %p206 = scmp.lt.s32.totalorder %s205, 1
        %s207 = scalar_select %p206, %s205, 1
        %s208 = smul.addr %s207, 4
        %s209 = scalar_lea.vmem %s2, %s208
        %p210 = pneg %p100
        %p211 = pneg %p97
        %p212 = pneg %p128
        %p213 = pneg %p125
        %s214 = sand.u32 %s115, 1
        %s215 = scalar_lea.sflag [#allocation3], %s214
        %s216 = sand.u32 %s115, 1
        %s217 = smul.addr %s216, 4
        %s218 = scalar_lea.vmem [#allocation5], %s217
        %s219 = smul.u32 2, %s23
        %p220 = scmp.lt.s32.totalorder %s22, 1
        %s221 = scalar_select %p220, %s22, 1
        %p222 = scmp.lt.s32.totalorder %s219, 1
        %s223 = scalar_select %p222, %s219, 1
        %s224 = smul.addr %s221, 4
        %s225 = sadd.s32 %s223, %s224
        %s226 = smul.addr %s225, 8
        %s227 = scalar_lea.vmem %s1, %s226
        %s228 = smul.u32 2, %s23
        %s229 = smul.u32 2, %s23
        %p230 = scmp.lt.s32.totalorder %s229, 1
        %s231 = scalar_select %p230, %s229, 1
        %s232 = smul.addr %s231, 4
        %s233 = scalar_lea.vmem %s2, %s232
        %s234 = smul.u32 2, %s23
        %s235 = smul.u32 2, %s23
        %s236 = sld [smem:[#allocation2 + %s22]]
        %v237 = vld [vmem:[%s233] ss:$4 sm:$0x3]
        %s238 = scalar_lea.vmem %s233, 1
        %v239 = vld [vmem:[%s238] ss:$4 sm:$0x3]
        %s240 = scalar_lea.vmem %s233, 2
        %v241 = vld [vmem:[%s240] ss:$4 sm:$0x3]
        %v242 = vld [vmem:[%s227] ss:$8 sm:$0x3]
        %v243 = vmul.f32 %v237, %v242
        %s244 = scalar_lea.vmem %s227, 1
        %v245 = vld [vmem:[%s244] ss:$8 sm:$0x3]
        %v246 = vmul.f32 %v239, %v245
        %v247 = vadd.f32 %v243, %v246
        %s248 = scalar_lea.vmem %s227, 2
        %v249 = vld [vmem:[%s248] ss:$8 sm:$0x3]
        %v250 = vmul.f32 %v241, %v249
        %v251 = vadd.f32 %v247, %v250
        %s252 = scalar_lea.vmem %s227, 3
        %v253 = vld [vmem:[%s252] ss:$8 sm:$0x3]
        %v254 = vadd.f32 %v251, %v253
        %s255 = scalar_lea.vmem %s227, 4
        %v256 = vld [vmem:[%s255] ss:$8 sm:$0x3]
        %v257 = vmul.f32 %v237, %v256
        %s258 = scalar_lea.vmem %s227, 5
        %v259 = vld [vmem:[%s258] ss:$8 sm:$0x3]
        %v260 = vmul.f32 %v239, %v259
        %v261 = vadd.f32 %v257, %v260
        %s262 = scalar_lea.vmem %s227, 6
        %v263 = vld [vmem:[%s262] ss:$8 sm:$0x3]
        %v264 = vmul.f32 %v241, %v263
        %v265 = vadd.f32 %v261, %v264
        %s266 = scalar_lea.vmem %s227, 7
        %v267 = vld [vmem:[%s266] ss:$8 sm:$0x3]
        %v268 = vadd.f32 %v265, %v267
        %s269 = scalar_lea.vmem %s227, 16
        %v270 = vld [vmem:[%s269] ss:$8 sm:$0x3]
        %v271 = vmul.f32 %v237, %v270
        %s272 = scalar_lea.vmem %s227, 17
        %v273 = vld [vmem:[%s272] ss:$8 sm:$0x3]
        %v274 = vmul.f32 %v239, %v273
        %v275 = vadd.f32 %v271, %v274
        %s276 = scalar_lea.vmem %s227, 18
        %v277 = vld [vmem:[%s276] ss:$8 sm:$0x3]
        %v278 = vmul.f32 %v241, %v277
        %v279 = vadd.f32 %v275, %v278
        %s280 = scalar_lea.vmem %s227, 19
        %v281 = vld [vmem:[%s280] ss:$8 sm:$0x3]
        %v282 = vadd.f32 %v279, %v281
        %v283 = vmul.f32 %v254, %v254
        %v284 = vmul.f32 %v268, %v268
        %v285 = vadd.f32 %v283, %v284
        %v286 = vmul.f32 %v282, %v282
        %v287 = vadd.f32 %v285, %v286
        %v288 = vrsqrt.pop %v287
        %v289 = vmul.f32 %v287, %v288
        %vm290 = vcmp.eq.f32.partialorder %v287, inf
        %v291 = vsel %vm290, %v287, %v289
        %vm292 = vcmp.eq.f32.partialorder %v287, 0.0
        %v293 = vand.u32 %v287, 2147483648
        %v294 = vsel %vm292, %v293, %v291
        %v295 = vadd.f32 %v294, 1e-05
        %v296 = vrcp.pop %v295
        %v297 = vmul.f32 %v282, %v296
        %v298 = vsub.f32 1.0, %v297
        %v299 = vadd.f32 %v297, 1.0
        %v300 = vrcp.pop %v299
        %v301 = vmul.f32 %v298, %v300
        %v302 = vrsqrt.pop %v301
        %v303 = vmul.f32 %v301, %v302
        %vm304 = vcmp.eq.f32.partialorder %v301, inf
        %v305 = vsel %vm304, %v301, %v303
        %vm306 = vcmp.eq.f32.partialorder %v301, 0.0
        %v307 = vand.u32 %v301, 2147483648
        %v308 = vsel %vm306, %v307, %v305
        %vm309 = vcmp.lt.f32.partialorder %v308, 0.0
        %v310 = vsel %vm309, -1.0, 1.0
        %v311 = vand.u32 2147483647, %v308
        %vm312 = vcmp.gt.f32.partialorder %v311, 2.4142137
        %vm313 = vmxor %vm312, 1
        %vm314 = vcmp.gt.f32.partialorder %v311, 0.41421357
        %vm315 = vmand %vm313, %vm314
        %v316 = vsel %vm312, %v311, 1.0
        %v317 = vrcp.pop %v316
        %v318 = vmul.f32 -1.0, %v317
        %v319 = vsub.f32 %v311, 1.0
        %v320 = vadd.f32 %v311, 1.0
        %v321 = vrcp.pop %v320
        %v322 = vmul.f32 %v319, %v321
        %v323 = vsel %vm315, %v322, %v311
        %v324 = vsel %vm312, %v318, %v323
        %v325 = vsel %vm315, 0.7853982, 0.0
        %v326 = vsel %vm312, 1.5707964, %v325
        %v327 = vmul.f32 %v324, %v324
        %v328 = vmul.f32 %v327, 0.080537446
        %v329 = vsub.f32 %v328, 0.13877685
        %v330 = vmul.f32 %v329, %v327
        %v331 = vadd.f32 %v330, 0.19977711
        %v332 = vmul.f32 %v331, %v327
        %v333 = vsub.f32 %v332, 0.3333295
        %v334 = vmul.f32 %v333, %v327
        %v335 = vmul.f32 %v334, %v324
        %v336 = vadd.f32 %v326, %v335
        %v337 = vadd.f32 %v336, %v324
        %v338 = vmul.f32 %v310, %v337
        %v339 = vmul.f32 %v338, 2.0
        %v340 = vmul.f32 %v339, 0.63661975
        %v341 = vsub.f32 %v340, 1.0
        %v342 = vadd.f32 %v254, 1e-05
        %v343 = vrcp.pop %v342
        %v344 = vmul.f32 %v268, %v343
        %vm345 = vcmp.lt.f32.partialorder %v344, 0.0
        %v346 = vsel %vm345, -1.0, 1.0
        %v347 = vand.u32 2147483647, %v344
        %vm348 = vcmp.gt.f32.partialorder %v347, 2.4142137
        %vm349 = vmxor %vm348, 1
        %vm350 = vcmp.gt.f32.partialorder %v347, 0.41421357
        %vm351 = vmand %vm349, %vm350
        %v352 = vsel %vm348, %v347, 1.0
        %v353 = vrcp.pop %v352
        %v354 = vmul.f32 -1.0, %v353
        %v355 = vsub.f32 %v347, 1.0
        %v356 = vadd.f32 %v347, 1.0
        %v357 = vrcp.pop %v356
        %v358 = vmul.f32 %v355, %v357
        %v359 = vsel %vm351, %v358, %v347
        %v360 = vsel %vm348, %v354, %v359
        %v361 = vsel %vm351, 0.7853982, 0.0
        %v362 = vsel %vm348, 1.5707964, %v361
        %v363 = vmul.f32 %v360, %v360
        %v364 = vmul.f32 %v363, 0.080537446
        %v365 = vsub.f32 %v364, 0.13877685
        %v366 = vmul.f32 %v365, %v363
        %v367 = vadd.f32 %v366, 0.19977711
        %v368 = vmul.f32 %v367, %v363
        %v369 = vsub.f32 %v368, 0.3333295
        %v370 = vmul.f32 %v369, %v363
        %v371 = vmul.f32 %v370, %v360
        %v372 = vadd.f32 %v362, %v371
        %v373 = vadd.f32 %v372, %v360
        %v374 = vmul.f32 %v346, %v373
        %vm375 = vcmp.lt.f32.partialorder %v254, 0.0
        %vm376 = vcmp.ge.f32.partialorder %v268, 0.0
        %v377 = vsel %vm376, 3.1415927, -3.1415927
        %v378 = vsel %vm375, %v377, 0.0
        %v379 = vadd.f32 %v374, %v378
        %v380 = vmul.f32 %v379, 0.31830987
        %v381 = vstv %s236
        %v382 = vadd.f32 %v380, %v381
        %v383 = vmul.f32 %v382, 1.5707964
        %v384 = vand.u32 2147483647, %v383
        %vm385 = vcmp.le.f32.partialorder %v384, 0.7853982
        %vm386 = vcmp.lt.s32.totalorder %v383, 0
        %v387 = vand.u32 %v383, 2139095040
        %v388 = vshrl.u32 %v387, 23
        %v389 = vsub.s32 %v388, 127
        %v390 = vand.u32 2147483647, %v383
        %v391 = vand.u32 %v390, 8388607
        %v392 = vor.u32 %v391, 8388608
        %v393 = vsub.s32 0, %v392
        %v394 = vadd.s32 %v389, 1
        %vm395 = vcmp.gt.s32.totalorder %v394, 0
        %v396 = vsel %vm395, %v394, 0
        %v397 = vshrl.u32 %v396, 5
        %v398 = vand.u32 %v396, 31
        %v399 = vsub.s32 32, %v398
        %v400 = vshrl.u32 683565275, %v399
        %v401 = vshll.u32 683565275, %v398
        %v402 = vshrl.u32 2475754826, %v399
        %v403 = vor.u32 %v401, %v402
        %v404 = vshll.u32 2475754826, %v398
        %v405 = vshrl.u32 2131351028, %v399
        %v406 = vor.u32 %v404, %v405
        %v407 = vshll.u32 2131351028, %v398
        %v408 = vshrl.u32 2102212464, %v399
        %v409 = vor.u32 %v407, %v408
        %v410 = vshll.u32 2102212464, %v398
        %v411 = vshrl.u32 920167782, %v399
        %v412 = vor.u32 %v410, %v411
        %v413 = vshll.u32 920167782, %v398
        %v414 = vshrl.u32 1326507024, %v399
        %v415 = vor.u32 %v413, %v414
        %vm416 = vcmp.lt.s32.totalorder %v397, 1
        %vm417 = vcmp.lt.s32.totalorder %v397, 2
        %vm418 = vcmp.lt.s32.totalorder %v397, 3
        %vm419 = vcmp.lt.s32.totalorder %v397, 4
        %v420 = vsel %vm416, %v400, %v403
        %v421 = vsel %vm419, %v409, 2102212464
        %v422 = vsel %vm418, %v406, %v421
        %v423 = vsel %vm417, %v420, %v422
        %v424 = vsel %vm416, %v403, %v406
        %v425 = vsel %vm419, %v412, 920167782
        %v426 = vsel %vm418, %v409, %v425
        %v427 = vsel %vm417, %v424, %v426
        %v428 = vsel %vm416, %v406, %v409
        %v429 = vsel %vm419, %v415, 1326507024
        %v430 = vsel %vm418, %v412, %v429
        %v431 = vsel %vm417, %v428, %v430
        %v432 = vshll.u32 %v392, 8
        %v433 = vmul.u32.u64.compose %v432, %v431
        %v434 = vextract.low.u32 %v433
        %v435 = vextract.high.u32 %v433
        %v436 = vmul.u32.u64.compose %v432, %v427
        %v437 = vextract.low.u32 %v436
        %v438 = vextract.high.u32 %v436
        %v439 = vmul.u32 %v432, %v423
        %v440 = vadd.s32 %v435, %v437
        %vm441 = vc.u32 %v435, %v437
        %v442 = vadd.s32 %v438, 1
        %v443 = vsel %vm441, %v442, %v438
        %v444 = vadd.s32 %v439, %v443
        %v445 = vadd.s32 %v444, 536870912
        %v446 = vshrl.u32 %v445, 30
        %v447 = vshll.u32 %v446, 30
        %v448 = vsub.s32 %v444, %v447
        %vm449 = vcmp.lt.s32.totalorder %v448, 0
        %v450 = vsub.s32 0, %v448
        %v451 = vsel %vm449, %v450, %v448
        %v452 = vclz %v451
        %v453 = vsub.s32 %v452, 2
        %vm454 = vcmp.gt.s32.totalorder 0, %v453
        %v455 = vsel %vm454, 0, %v453
        %v456 = vsub.s32 32, %v455
        %v457 = vshll.u32 %v448, %v455
        %v458 = vshrl.u32 %v440, %v456
        %v459 = vor.u32 %v457, %v458
        %v460 = vsub.s32 4294967266, %v455
        %v461 = vadd.s32 %v460, 127
        %v462 = vshll.u32 %v461, 23
        %v463 = vor.u32 4788187, %v462
        %v464 = vand.u32 2147483647, %v463
        %v466 = vcvt.s32.f32 %v459
        %v467 = vmul.f32 %v466, %v464
        %v468 = vxor.u32 %v467, 2147483648
        %v469 = vsel %vm386, %v468, %v467
        %v470 = vsub.s32 4, %v446
        %v471 = vsel %vm386, %v470, %v446
        %v472 = vsel %vm385, %v383, %v469
        %v473 = vsel %vm385, 0, %v471
        %v474 = vcosq.f32.pop %v472
        %v475 = vsinq.f32.pop %v472
        %vm476 = vweird.f32 %v383
        %v477 = vadd.s32 %v473, 3
        %v478 = vand.u32 %v477, 3
        %vm479 = vcmp.lt.s32.totalorder %v478, 2
        %vm480 = vcmp.eq.s32.totalorder %v478, 0
        %v481 = vxor.u32 %v475, 2147483648
        %v482 = vsel %vm480, %v474, %v481
        %vm483 = vcmp.eq.s32.totalorder %v478, 2
        %v484 = vxor.u32 %v474, 2147483648
        %v485 = vsel %vm483, %v484, %v475
        %v486 = vsel %vm479, %v482, %v485
        %v487 = vsel %vm476, nan, %v486
        %v488 = vand.u32 2147483647, %v383
        %vm489 = vcmp.le.f32.partialorder %v488, 0.7853982
        %vm490 = vcmp.lt.s32.totalorder %v383, 0
        %v491 = vand.u32 %v383, 2139095040
        %v492 = vshrl.u32 %v491, 23
        %v493 = vsub.s32 %v492, 127
        %v494 = vand.u32 2147483647, %v383
        %v495 = vand.u32 %v494, 8388607
        %v496 = vor.u32 %v495, 8388608
        %v497 = vsub.s32 0, %v496
        %v498 = vadd.s32 %v493, 1
        %vm499 = vcmp.gt.s32.totalorder %v498, 0
        %v500 = vsel %vm499, %v498, 0
        %v501 = vshrl.u32 %v500, 5
        %v502 = vand.u32 %v500, 31
        %v503 = vsub.s32 32, %v502
        %v504 = vshrl.u32 683565275, %v503
        %v505 = vshll.u32 683565275, %v502
        %v506 = vshrl.u32 2475754826, %v503
        %v507 = vor.u32 %v505, %v506
        %v508 = vshll.u32 2475754826, %v502
        %v509 = vshrl.u32 2131351028, %v503
        %v510 = vor.u32 %v508, %v509
        %v511 = vshll.u32 2131351028, %v502
        %v512 = vshrl.u32 2102212464, %v503
        %v513 = vor.u32 %v511, %v512
        %v514 = vshll.u32 2102212464, %v502
        %v515 = vshrl.u32 920167782, %v503
        %v516 = vor.u32 %v514, %v515
        %v517 = vshll.u32 920167782, %v502
        %v518 = vshrl.u32 1326507024, %v503
        %v519 = vor.u32 %v517, %v518
        %vm520 = vcmp.lt.s32.totalorder %v501, 1
        %vm521 = vcmp.lt.s32.totalorder %v501, 2
        %vm522 = vcmp.lt.s32.totalorder %v501, 3
        %vm523 = vcmp.lt.s32.totalorder %v501, 4
        %v524 = vsel %vm520, %v504, %v507
        %v525 = vsel %vm523, %v513, 2102212464
        %v526 = vsel %vm522, %v510, %v525
        %v527 = vsel %vm521, %v524, %v526
        %v528 = vsel %vm520, %v507, %v510
        %v529 = vsel %vm523, %v516, 920167782
        %v530 = vsel %vm522, %v513, %v529
        %v531 = vsel %vm521, %v528, %v530
        %v532 = vsel %vm520, %v510, %v513
        %v533 = vsel %vm523, %v519, 1326507024
        %v534 = vsel %vm522, %v516, %v533
        %v535 = vsel %vm521, %v532, %v534
        %v536 = vshll.u32 %v496, 8
        %v537 = vmul.u32.u64.compose %v536, %v535
        %v538 = vextract.low.u32 %v537
        %v539 = vextract.high.u32 %v537
        %v540 = vmul.u32.u64.compose %v536, %v531
        %v541 = vextract.low.u32 %v540
        %v542 = vextract.high.u32 %v540
        %v543 = vmul.u32 %v536, %v527
        %v544 = vadd.s32 %v539, %v541
        %vm545 = vc.u32 %v539, %v541
        %v546 = vadd.s32 %v542, 1
        %v547 = vsel %vm545, %v546, %v542
        %v548 = vadd.s32 %v543, %v547
        %v549 = vadd.s32 %v548, 536870912
        %v550 = vshrl.u32 %v549, 30
        %v551 = vshll.u32 %v550, 30
        %v552 = vsub.s32 %v548, %v551
        %vm553 = vcmp.lt.s32.totalorder %v552, 0
        %v554 = vsub.s32 0, %v552
        %v555 = vsel %vm553, %v554, %v552
        %v556 = vclz %v555
        %v557 = vsub.s32 %v556, 2
        %vm558 = vcmp.gt.s32.totalorder 0, %v557
        %v559 = vsel %vm558, 0, %v557
        %v560 = vsub.s32 32, %v559
        %v561 = vshll.u32 %v552, %v559
        %v562 = vshrl.u32 %v544, %v560
        %v563 = vor.u32 %v561, %v562
        %v564 = vsub.s32 4294967266, %v559
        %v565 = vadd.s32 %v564, 127
        %v566 = vshll.u32 %v565, 23
        %v567 = vor.u32 4788187, %v566
        %v568 = vand.u32 2147483647, %v567
        %v570 = vcvt.s32.f32 %v563
        %v571 = vmul.f32 %v570, %v568
        %v572 = vxor.u32 %v571, 2147483648
        %v573 = vsel %vm490, %v572, %v571
        %v574 = vsub.s32 4, %v550
        %v575 = vsel %vm490, %v574, %v550
        %v576 = vsel %vm489, %v383, %v573
        %v577 = vsel %vm489, 0, %v575
        %v578 = vcosq.f32.pop %v576
        %v579 = vsinq.f32.pop %v576
        %vm580 = vweird.f32 %v383
        %v581 = vand.u32 %v577, 3
        %vm582 = vcmp.lt.s32.totalorder %v581, 2
        %vm583 = vcmp.eq.s32.totalorder %v581, 0
        %v584 = vxor.u32 %v579, 2147483648
        %v585 = vsel %vm583, %v578, %v584
        %vm586 = vcmp.eq.s32.totalorder %v581, 2
        %v587 = vxor.u32 %v578, 2147483648
        %v588 = vsel %vm586, %v587, %v579
        %v589 = vsel %vm582, %v585, %v588
        %v590 = vsel %vm580, nan, %v589
        %v591 = vrcp.pop %v590
        %v592 = vmul.f32 %v487, %v591
        %vm593 = vcmp.lt.f32.partialorder %v592, 0.0
        %v594 = vsel %vm593, -1.0, 1.0
        %v595 = vand.u32 2147483647, %v592
        %vm596 = vcmp.gt.f32.partialorder %v595, 2.4142137
        %vm597 = vmxor %vm596, 1
        %vm598 = vcmp.gt.f32.partialorder %v595, 0.41421357
        %vm599 = vmand %vm597, %vm598
        %v600 = vsel %vm596, %v595, 1.0
        %v601 = vrcp.pop %v600
        %v602 = vmul.f32 -1.0, %v601
        %v603 = vsub.f32 %v595, 1.0
        %v604 = vadd.f32 %v595, 1.0
        %v605 = vrcp.pop %v604
        %v606 = vmul.f32 %v603, %v605
        %v607 = vsel %vm599, %v606, %v595
        %v608 = vsel %vm596, %v602, %v607
        %v609 = vsel %vm599, 0.7853982, 0.0
        %v610 = vsel %vm596, 1.5707964, %v609
        %v611 = vmul.f32 %v608, %v608
        %v612 = vmul.f32 %v611, 0.080537446
        %v613 = vsub.f32 %v612, 0.13877685
        %v614 = vmul.f32 %v613, %v611
        %v615 = vadd.f32 %v614, 0.19977711
        %v616 = vmul.f32 %v615, %v611
        %v617 = vsub.f32 %v616, 0.3333295
        %v618 = vmul.f32 %v617, %v611
        %v619 = vmul.f32 %v618, %v608
        %v620 = vadd.f32 %v610, %v619
        %v621 = vadd.f32 %v620, %v608
        %v622 = vmul.f32 %v594, %v621
        %v623 = vmul.f32 %v622, 0.63661975
        %v624 = vlaneseq
        %vm625 = vcmp.ge.s32.totalorder %v624, 0
        %vm626 = vcmp.lt.s32.totalorder %v624, 256
        %vm627 = vmand %vm625, %vm626
        %628 = vst.msk [vmem:[%s218] ss:$2 sm:$0x3] %vm627, %v341
        %s629 = scalar_lea.vmem %s218, 1 [#allocation5]
        %630 = vst.msk [vmem:[%s629] ss:$2 sm:$0x3] %vm627, %v623
        %s631 = sand.u32 %s115, 1
        %s632 = scalar_lea.sflag [#allocation3], %s631
        %s633 = sand.u32 %s115, 1
        %s634 = smul.addr %s633, 4
        %s635 = scalar_lea.vmem [#allocation5], %s634
        // Predicated region
        $region37: #{tpu_custom_call.1} parent=31 // pred_check
          %p636 = pneg %p125
        $region38: #{tpu_custom_call.1} parent=31 // pred_check_branch
          %638 = sbr.rel (%p636) target = $region40
        $region39: #{tpu_custom_call.1} parent=31 // pred_region
          %s639 = smul.u32 2, %s23
          %s641 = ssub.s32 64, 64
          %642 = vsyncadd %s632, %s641
          %s643 = smul.addr %s22, 2
          %s644 = sadd.s32 %s639, %s643
          %s645 = smul.addr %s644, 32
          %s646 = scalar_lea.hbm %s3, %s645
          %s648 = sshll.u32 %s635, 4
          %s649 = int_to_ptr.vmem [resolvable:$true] %s648
          %651 = dma.vmem_to_hbm [thread:$0]  %s649, 64, %s646, %s632
        $region40: #{tpu_custom_call.1} parent=31 // pred_fallthru
          _
      $region32: #{tpu_custom_call.1} parent=5 // pred_fallthru
        _
      %p652 = scmp.le.s32.totalorder 2, %s13
      // Predicated region
      $region41: #{tpu_custom_call.1} parent=5 // pred_check
        %p653 = pneg %p652
      $region42: #{tpu_custom_call.1} parent=5 // pred_check_branch
        %655 = sbr.rel (%p653) target = $region44
      $region43: #{tpu_custom_call.1} parent=5 // pred_region
        %s656 = ssub.s32 %s13, 2
        // Predicated region
        $region45: #{tpu_custom_call.1} parent=43 // pred_check
          %p657 = pneg %p131
        $region46: #{tpu_custom_call.1} parent=43 // pred_check_branch
          %659 = sbr.rel (%p657) target = $region48
        $region47: #{tpu_custom_call.1} parent=43 // pred_region
          %s660 = sand.u32 %s116, 1
          %s661 = scalar_lea.sflag [#allocation3], %s660
          %s662 = sand.u32 %s116, 1
          %s663 = smul.addr %s662, 4
          %s664 = scalar_lea.vmem [#allocation5], %s663
          %665 = dma.done %s661, 64
        $region48: #{tpu_custom_call.1} parent=43 // pred_fallthru
          _
      $region44: #{tpu_custom_call.1} parent=5 // pred_fallthru
        _
    $region6: #{tpu_custom_call.1} parent=1 // loop_footer
      %s17 = sadd.s32 1, %s13
    $region7: #{tpu_custom_call.1} parent=1 // loop_footer_branch
      %12 = sbr.rel target = $region3
    $region8: #{tpu_custom_call.1} parent=1 // loop_exit
      _
    %666 = vsyncpa [#allocation3], 1
    %s667 = scalar_lea.sflag [#allocation3], 1
    %668 = vsyncpa %s667, 1
    %669 = vsyncpa [#allocation4], 1
    %s670 = scalar_lea.sflag [#allocation4], 1
    %671 = vsyncpa %s670, 1

</llo_original>
